<compile_context>
chip_gen: v5e
topology: v5e:2x2
jax: 0.10.0
libtpu: 0.0.40
codegen_flags: <defaults>
</compile_context>

<pallas_src>
import math

import jax
import jax.numpy as jnp
from jax import lax
from jax.experimental import pallas as pl
from jax.experimental.pallas import tpu as pltpu

N_NODES = 16
DIM_IN = 4
DIM_H = 32
WINDOW = 1          # matches TGNN.MPNNLSTM(dim_in, dim_h, num_nodes, 1, 0.5)
BN_EPS = 1e-5

# ---- packed parameter slab layout (rows x 128 lanes, f32) ------------------ #
SLAB_LANES = 128
_R_W1 = 0                       # rows 0:DIM_IN           W1          (lanes 0:H)
_R_W2 = 8                       # rows 8:8+H              W2 (BN1 scale folded)
_R_WL1 = _R_W2 + DIM_H          # rows 40:40+2H           LSTM1 W_ih, gates [i|f|o|g]
_R_WL2 = _R_WL1 + 2 * DIM_H     # rows 104:104+H          LSTM2 W_ih, gates [i|f|o|g]
_R_BIAS = _R_WL2 + DIM_H        # rows 136:144            bias block:
#   +0 b1 (0:H)   +1 b2 (0:H)   +2 tb2 (0:H, BN1 shift pushed through W2)
#   +3 bl1 (0:4H, BN shifts folded)   +4 bl2 (0:4H)
#   +5 head weights (0:2H+C)          +6 head bias (lane 0)
SLAB_ROWS = _R_BIAS + 8

assert 4 * DIM_H == SLAB_LANES
assert 2 * DIM_H + DIM_IN <= SLAB_LANES


# --------------------------------------------------------------------------- #
# Pallas kernel: whole forward pass, single invocation, all operands in VMEM.
# (For N >> toy size the dense (N,N) adjacency would need a row-block grid —
#  it hits v7x's 64 MiB VMEM first; for repeated calls add a 'parallel' batch
#  grid axis so v7x's two TensorCores split the work.)
# --------------------------------------------------------------------------- #
def mpnnlstm_kernel(edges_ref, x_ref, slab_ref, out_ref):
    f32 = jnp.float32
    N, C = x_ref.shape
    H = DIM_H
    E = edges_ref.shape[1]

    X = x_ref[...]                                     # (N, C)

    # ---- build adjacency with self loops from the packed edge block -------
    # edges_ref rows: 0 = src ids, 1 = dst ids, 2 = edge weight (ids exact in f32).
    src = edges_ref[0:1, :]                            # (1, E)
    dst = edges_ref[1:2, :]
    w = edges_ref[2:3, :]
    node = lax.broadcasted_iota(jnp.int32, (N, E), 0).astype(f32)   # (N, E)
    d_oh = jnp.where(node == dst, 1.0, 0.0)            # (N, E)  one-hot over dst
    s_oh = jnp.where(node == src, 1.0, 0.0)            # (N, E)  one-hot over src
    # A[d, s] = sum_e w_e * [dst_e == d] * [src_e == s]  (== scatter_add; duplicate
    # edges accumulate, matching PyG semantics). Zero-weight pad edges contribute 0.
    A = lax.dot_general(d_oh * w, s_oh,
                        dimension_numbers=(((1,), (1,)), ((), ())),
                        preferred_element_type=f32)    # (N, N)
    r_i = lax.broadcasted_iota(jnp.int32, (N, N), 0)
    c_i = lax.broadcasted_iota(jnp.int32, (N, N), 1)
    A = A + jnp.where(r_i == c_i, 1.0, 0.0)            # self loops, weight 1
    deg = jnp.sum(A, axis=1, keepdims=True)            # (N, 1) in-degree at target
    dinv = jnp.where(deg > 0.0, lax.rsqrt(deg), 0.0)   # D^-1/2

    def prop(m):                                       # A_hat @ m, norm folded in
        return dinv * jnp.dot(A, dinv * m, preferred_element_type=f32)

    # ---- static slices of the packed parameter slab ------------------------
    W1 = slab_ref[_R_W1:_R_W1 + C, 0:H]
    W2 = slab_ref[_R_W2:_R_W2 + H, 0:H]                # BN1 scale pre-folded
    WL1 = slab_ref[_R_WL1:_R_WL1 + 2 * H, :]           # BN1/BN2 scales pre-folded
    WL2 = slab_ref[_R_WL2:_R_WL2 + H, :]
    b1 = slab_ref[_R_BIAS + 0:_R_BIAS + 1, 0:H]
    b2 = slab_ref[_R_BIAS + 1:_R_BIAS + 2, 0:H]
    tb2 = slab_ref[_R_BIAS + 2:_R_BIAS + 3, 0:H]       # BN1 shift pushed through W2
    bl1 = slab_ref[_R_BIAS + 3:_R_BIAS + 4, :]         # BN shifts pre-folded
    bl2 = slab_ref[_R_BIAS + 4:_R_BIAS + 5, :]
    wh = slab_ref[_R_BIAS + 5:_R_BIAS + 6, :]          # head weights, lanes 0:2H+C
    bh = slab_ref[_R_BIAS + 6:_R_BIAS + 7, 0:1]

    # ---- GCNConv1 -> relu (BN1 folded downstream; dropout eval = id) -------
    h1 = jnp.maximum(prop(jnp.dot(X, W1, preferred_element_type=f32)) + b1, 0.0)
    # ---- GCNConv2 -> relu (W2 carries BN1 scale, tb2 carries BN1 shift) ----
    h2 = jnp.maximum(prop(jnp.dot(h1, W2, preferred_element_type=f32) + tb2) + b2,
                     0.0)

    # ---- LSTM 1: one fused 128-lane gate matmul, gates = [i|f|o|g] ---------
    # seq_len = window = 1 and (h0, c0) = 0, so W_hh drops out and c1 = i*g.
    h12 = jnp.concatenate([h1, h2], axis=1)            # (N, 2H)
    g1 = jnp.dot(h12, WL1, preferred_element_type=f32) + bl1    # (N, 128)
    sg1 = jax.nn.sigmoid(g1)                           # one EUP slab pass
    c1 = sg1[:, 0:H] * jnp.tanh(g1[:, 3 * H:4 * H])    # i * g
    H1 = sg1[:, 2 * H:3 * H] * jnp.tanh(c1)            # o * tanh(c)

    # ---- LSTM 2 -------------------------------------------------------------
    g2 = jnp.dot(H1, WL2, preferred_element_type=f32) + bl2     # (N, 128)
    sg2 = jax.nn.sigmoid(g2)
    c2 = sg2[:, 0:H] * jnp.tanh(g2[:, 3 * H:4 * H])
    H2 = sg2[:, 2 * H:3 * H] * jnp.tanh(c2)

    # ---- head: tanh(Linear(relu(concat[H1, H2, X]))), dropout eval = id ----
    # 1-wide output -> per-segment VPU multiply + XLU lane reduce (no 1-lane MXU
    # matmuls, no (2H+C)-lane concat relayout). relu distributes over the concat.
    y = (jnp.sum(jnp.maximum(H1, 0.0) * wh[:, 0:H], axis=1, keepdims=True)
         + jnp.sum(jnp.maximum(H2, 0.0) * wh[:, H:2 * H], axis=1, keepdims=True)
         + jnp.sum(jnp.maximum(X, 0.0) * wh[:, 2 * H:2 * H + C], axis=1,
                   keepdims=True)
         + bh)
    out_ref[...] = jnp.tanh(y)


# --------------------------------------------------------------------------- #
# Host-side: raw (PyTorch-layout) params -> folded, packed slab.
# --------------------------------------------------------------------------- #
def init_raw_params(key, dim_in, dim_h):
    ks = jax.random.split(key, 10)
    u = lambda k, shape, b: jax.random.uniform(k, shape, jnp.float32, -b, b)
    p = {}
    # GCNConv 1 / 2 (weights stored (in, out))
    p["w1"] = u(ks[0], (dim_in, dim_h), 1.0 / math.sqrt(dim_in))
    p["b1"] = jnp.zeros((dim_h,), jnp.float32)
    p["w2"] = u(ks[1], (dim_h, dim_h), 1.0 / math.sqrt(dim_h))
    p["b2"] = jnp.zeros((dim_h,), jnp.float32)
    # BatchNorm1d eval parameters (fresh model: gamma=1, beta=0, mean=0, var=1)
    for i in (1, 2):
        p[f"bn{i}_gamma"] = jnp.ones((dim_h,), jnp.float32)
        p[f"bn{i}_beta"] = jnp.zeros((dim_h,), jnp.float32)
        p[f"bn{i}_mean"] = jnp.zeros((dim_h,), jnp.float32)
        p[f"bn{i}_var"] = jnp.ones((dim_h,), jnp.float32)
    # LSTMs, torch layout: W_ih (4H, in) with gate blocks [i, f, g, o].
    # W_hh never contributes (zero initial hidden state) so it is not created.
    bnd = 1.0 / math.sqrt(dim_h)
    p["l1_wih"] = u(ks[2], (4 * dim_h, 2 * dim_h), bnd)
    p["l1_bih"] = u(ks[3], (4 * dim_h,), bnd)
    p["l1_bhh"] = u(ks[4], (4 * dim_h,), bnd)
    p["l2_wih"] = u(ks[5], (4 * dim_h, dim_h), bnd)
    p["l2_bih"] = u(ks[6], (4 * dim_h,), bnd)
    p["l2_bhh"] = u(ks[7], (4 * dim_h,), bnd)
    # head Linear: (2H + C) -> 1
    bl = 1.0 / math.sqrt(2 * dim_h + dim_in)
    p["lin_w"] = u(ks[8], (2 * dim_h + dim_in, 1), bl)
    p["lin_b"] = u(ks[9], (1,), bl)
    return p


def _reorder_gates(m):
    """torch gate blocks [i, f, g, o] along dim 0 -> kernel order [i, f, o, g]."""
    H = DIM_H
    i, f, g, o = (m[k * H:(k + 1) * H] for k in range(4))
    return jnp.concatenate([i, f, o, g], axis=0)


def pack_params(p, dim_in, dim_h):
    """Fold eval-mode BN into downstream weights/biases and pack into one slab."""
    H, C = dim_h, dim_in
    # general BN-eval affine: y = s*x + t
    s1 = p["bn1_gamma"] / jnp.sqrt(p["bn1_var"] + BN_EPS)
    t1 = p["bn1_beta"] - p["bn1_mean"] * s1
    s2 = p["bn2_gamma"] / jnp.sqrt(p["bn2_var"] + BN_EPS)
    t2 = p["bn2_beta"] - p["bn2_mean"] * s2

    # LSTM1 input weight -> (2H, 4H) lane-stacked [i|f|o|g]; rows 0:H act on h1.
    wl1 = _reorder_gates(p["l1_wih"]).T                  # (2H, 4H), unscaled
    wl1a, wl1b = wl1[:H], wl1[H:]
    bl1 = _reorder_gates(p["l1_bih"] + p["l1_bhh"])      # (4H,)
    bl1 = bl1 + t1 @ wl1a + t2 @ wl1b                    # fold BN shifts
    wl1_folded = jnp.concatenate([s1[:, None] * wl1a,    # fold BN scales
                                  s2[:, None] * wl1b], axis=0)

    wl2 = _reorder_gates(p["l2_wih"]).T                  # (H, 4H)
    bl2 = _reorder_gates(p["l2_bih"] + p["l2_bhh"])      # (4H,)

    w2_folded = s1[:, None] * p["w2"]                    # BN1 scale into W2
    tb2 = t1 @ p["w2"]                                   # BN1 shift, exact:
    # (s1*h + t1) @ W2 == h @ (s1[:,None]*W2) + t1 @ W2, added before propagation.

    slab = jnp.zeros((SLAB_ROWS, SLAB_LANES), jnp.float32)
    slab = slab.at[_R_W1:_R_W1 + C, 0:H].set(p["w1"])
    slab = slab.at[_R_W2:_R_W2 + H, 0:H].set(w2_folded)
    slab = slab.at[_R_WL1:_R_WL1 + 2 * H, 0:4 * H].set(wl1_folded)
    slab = slab.at[_R_WL2:_R_WL2 + H, 0:4 * H].set(wl2)
    slab = slab.at[_R_BIAS + 0, 0:H].set(p["b1"])
    slab = slab.at[_R_BIAS + 1, 0:H].set(p["b2"])
    slab = slab.at[_R_BIAS + 2, 0:H].set(tb2)
    slab = slab.at[_R_BIAS + 3, 0:4 * H].set(bl1)
    slab = slab.at[_R_BIAS + 4, 0:4 * H].set(bl2)
    slab = slab.at[_R_BIAS + 5, 0:2 * H + C].set(p["lin_w"][:, 0])
    slab = slab.at[_R_BIAS + 6, 0].set(p["lin_b"][0])
    return slab


# --------------------------------------------------------------------------- #
# Wrapper: pack edges into one lane-aligned f32 block, launch the kernel once.
# --------------------------------------------------------------------------- #
def _pack_edges(edge_index, edge_weight):
    e = edge_index.shape[1]
    e_pad = ((e + 127) // 128) * 128                     # lane-dense edge block
    src = jnp.pad(edge_index[0].astype(jnp.float32), (0, e_pad - e))
    dst = jnp.pad(edge_index[1].astype(jnp.float32), (0, e_pad - e))
    w = jnp.pad(edge_weight.astype(jnp.float32), (0, e_pad - e))
    edges = jnp.stack([src, dst, w])                     # (3, e_pad)
    return jnp.pad(edges, ((0, 5), (0, 0)))              # (8, e_pad)


@jax.jit
def mpnnlstm_forward(x, edge_index, edge_weight, slab):
    n = x.shape[0]
    edges = _pack_edges(edge_index, edge_weight)
    vmem = pl.BlockSpec(memory_space=pltpu.MemorySpace.VMEM)
    return pl.pallas_call(
        mpnnlstm_kernel,
        out_shape=jax.ShapeDtypeStruct((n, 1), jnp.float32),
        in_specs=[vmem, vmem, vmem],
        out_specs=vmem,
    )(edges, x, slab)


if __name__ == "__main__":
    key = jax.random.PRNGKey(0)
    k_x, k_e, k_w, k_p = jax.random.split(key, 4)

    n, c, h = N_NODES, DIM_IN, DIM_H
    x = jax.random.normal(k_x, (n, c), jnp.float32)
    num_edges = 48
    edge_index = jax.random.randint(k_e, (2, num_edges), 0, n, jnp.int32)
    edge_weight = jax.random.uniform(k_w, (num_edges,), jnp.float32, 0.1, 1.0)

    raw = init_raw_params(k_p, c, h)
    slab = pack_params(raw, c, h)          # one-time host-side BN fold + packing

    out = mpnnlstm_forward(x, edge_index, edge_weight, slab)
    jax.block_until_ready(out)

    assert out.shape == (n, 1) and out.dtype == jnp.float32
    assert bool(jnp.all(jnp.isfinite(out)))
    print("KERNEL_OK")
</pallas_src>

<mosaic_0001>
module attributes {stable_mosaic.version = 11 : i64} {
  func.func @mpnnlstm_kernel(%arg0: memref<8x128xf32, #tpu.memory_space<vmem>>, %arg1: memref<16x4xf32, #tpu.memory_space<vmem>>, %arg2: memref<144x128xf32, #tpu.memory_space<vmem>>, %arg3: memref<16x1xf32, #tpu.memory_space<vmem>>) attributes {dimension_semantics = [], scalar_prefetch = 0 : i64, scratch_operands = 0 : i64, tpu.core_type = #tpu.core_type<tc>} {
    %c0 = arith.constant 0 : index
    %c0_0 = arith.constant 0 : index
    %0 = vector.load %arg1[%c0, %c0_0] : memref<16x4xf32, #tpu.memory_space<vmem>>, vector<16x4xf32>
    %c0_1 = arith.constant 0 : index
    %c0_2 = arith.constant 0 : index
    %1 = vector.load %arg0[%c0_1, %c0_2] : memref<8x128xf32, #tpu.memory_space<vmem>>, vector<1x128xf32>
    %c1 = arith.constant 1 : index
    %c0_3 = arith.constant 0 : index
    %2 = vector.load %arg0[%c1, %c0_3] : memref<8x128xf32, #tpu.memory_space<vmem>>, vector<1x128xf32>
    %c2 = arith.constant 2 : index
    %c0_4 = arith.constant 0 : index
    %3 = vector.load %arg0[%c2, %c0_4] : memref<8x128xf32, #tpu.memory_space<vmem>>, vector<1x128xf32>
    %4 = tpu.iota {dimensions = array<i32: 0>} : vector<16x128xi32>
    %5 = arith.sitofp %4 : vector<16x128xi32> to vector<16x128xf32>
    %6 = vector.broadcast %2 : vector<1x128xf32> to vector<16x128xf32>
    %7 = arith.cmpf oeq, %5, %6 : vector<16x128xf32>
    %cst = arith.constant 1.000000e+00 : f32
    %cst_5 = arith.constant 0.000000e+00 : f32
    %8 = vector.broadcast %cst : f32 to vector<16x128xf32>
    %9 = vector.broadcast %cst_5 : f32 to vector<16x128xf32>
    %10 = arith.select %7, %8, %9 : vector<16x128xi1>, vector<16x128xf32>
    %11 = vector.broadcast %1 : vector<1x128xf32> to vector<16x128xf32>
    %12 = arith.cmpf oeq, %5, %11 : vector<16x128xf32>
    %cst_6 = arith.constant 1.000000e+00 : f32
    %cst_7 = arith.constant 0.000000e+00 : f32
    %13 = vector.broadcast %cst_6 : f32 to vector<16x128xf32>
    %14 = vector.broadcast %cst_7 : f32 to vector<16x128xf32>
    %15 = arith.select %12, %13, %14 : vector<16x128xi1>, vector<16x128xf32>
    %16 = vector.broadcast %3 : vector<1x128xf32> to vector<16x128xf32>
    %17 = arith.mulf %10, %16 : vector<16x128xf32>
    %cst_8 = arith.constant dense<0.000000e+00> : vector<16x16xf32>
    %18 = tpu.matmul %17, %15, %cst_8 {dimension_numbers = #tpu.dot_dimension_numbers<[1], [1], [0], [0], [0, 0, 1, 0], [], []>} : vector<16x128xf32>, vector<16x128xf32>, vector<16x16xf32> -> vector<16x16xf32>
    %19 = tpu.iota {dimensions = array<i32: 0>} : vector<16x16xi32>
    %20 = tpu.iota {dimensions = array<i32: 1>} : vector<16x16xi32>
    %21 = arith.cmpi eq, %19, %20 : vector<16x16xi32>
    %cst_9 = arith.constant 1.000000e+00 : f32
    %cst_10 = arith.constant 0.000000e+00 : f32
    %22 = vector.broadcast %cst_9 : f32 to vector<16x16xf32>
    %23 = vector.broadcast %cst_10 : f32 to vector<16x16xf32>
    %24 = arith.select %21, %22, %23 : vector<16x16xi1>, vector<16x16xf32>
    %25 = arith.addf %18, %24 : vector<16x16xf32>
    %cst_11 = arith.constant dense<0.000000e+00> : vector<16xf32>
    %26 = vector.multi_reduction <add>, %25, %cst_11 [1] : vector<16x16xf32> to vector<16xf32>
    %27 = vector.shape_cast %26 : vector<16xf32> to vector<16x1xf32>
    %cst_12 = arith.constant 0.000000e+00 : f32
    %28 = vector.broadcast %cst_12 : f32 to vector<16x1xf32>
    %29 = arith.cmpf ogt, %27, %28 : vector<16x1xf32>
    %30 = math.rsqrt %27 : vector<16x1xf32>
    %cst_13 = arith.constant 0.000000e+00 : f32
    %31 = vector.broadcast %cst_13 : f32 to vector<16x1xf32>
    %32 = arith.select %29, %30, %31 : vector<16x1xi1>, vector<16x1xf32>
    %c0_14 = arith.constant 0 : index
    %c0_15 = arith.constant 0 : index
    %33 = vector.load %arg2[%c0_14, %c0_15] : memref<144x128xf32, #tpu.memory_space<vmem>>, vector<4x32xf32>
    %c8 = arith.constant 8 : index
    %c0_16 = arith.constant 0 : index
    %34 = vector.load %arg2[%c8, %c0_16] : memref<144x128xf32, #tpu.memory_space<vmem>>, vector<32x32xf32>
    %c40 = arith.constant 40 : index
    %c0_17 = arith.constant 0 : index
    %35 = vector.load %arg2[%c40, %c0_17] : memref<144x128xf32, #tpu.memory_space<vmem>>, vector<64x128xf32>
    %c104 = arith.constant 104 : index
    %c0_18 = arith.constant 0 : index
    %36 = vector.load %arg2[%c104, %c0_18] : memref<144x128xf32, #tpu.memory_space<vmem>>, vector<32x128xf32>
    %c136 = arith.constant 136 : index
    %c0_19 = arith.constant 0 : index
    %37 = vector.load %arg2[%c136, %c0_19] : memref<144x128xf32, #tpu.memory_space<vmem>>, vector<1x32xf32>
    %c137 = arith.constant 137 : index
    %c0_20 = arith.constant 0 : index
    %38 = vector.load %arg2[%c137, %c0_20] : memref<144x128xf32, #tpu.memory_space<vmem>>, vector<1x32xf32>
    %c138 = arith.constant 138 : index
    %c0_21 = arith.constant 0 : index
    %39 = vector.load %arg2[%c138, %c0_21] : memref<144x128xf32, #tpu.memory_space<vmem>>, vector<1x32xf32>
    %c139 = arith.constant 139 : index
    %c0_22 = arith.constant 0 : index
    %40 = vector.load %arg2[%c139, %c0_22] : memref<144x128xf32, #tpu.memory_space<vmem>>, vector<1x128xf32>
    %c140 = arith.constant 140 : index
    %c0_23 = arith.constant 0 : index
    %41 = vector.load %arg2[%c140, %c0_23] : memref<144x128xf32, #tpu.memory_space<vmem>>, vector<1x128xf32>
    %c141 = arith.constant 141 : index
    %c0_24 = arith.constant 0 : index
    %42 = vector.load %arg2[%c141, %c0_24] : memref<144x128xf32, #tpu.memory_space<vmem>>, vector<1x128xf32>
    %c142 = arith.constant 142 : index
    %c0_25 = arith.constant 0 : index
    %43 = vector.load %arg2[%c142, %c0_25] : memref<144x128xf32, #tpu.memory_space<vmem>>, vector<1x1xf32>
    %cst_26 = arith.constant dense<0.000000e+00> : vector<16x32xf32>
    %44 = tpu.matmul %0, %33, %cst_26 {dimension_numbers = #tpu.dot_dimension_numbers<[1], [0], [0], [1], [0, 0, 1, 1], [], []>} : vector<16x4xf32>, vector<4x32xf32>, vector<16x32xf32> -> vector<16x32xf32>
    %45 = vector.broadcast %32 : vector<16x1xf32> to vector<16x32xf32>
    %46 = arith.mulf %45, %44 : vector<16x32xf32>
    %cst_27 = arith.constant dense<0.000000e+00> : vector<16x32xf32>
    %47 = tpu.matmul %25, %46, %cst_27 {dimension_numbers = #tpu.dot_dimension_numbers<[1], [0], [0], [1], [0, 0, 1, 1], [], []>} : vector<16x16xf32>, vector<16x32xf32>, vector<16x32xf32> -> vector<16x32xf32>
    %48 = vector.broadcast %32 : vector<16x1xf32> to vector<16x32xf32>
    %49 = arith.mulf %48, %47 : vector<16x32xf32>
    %50 = vector.broadcast %37 : vector<1x32xf32> to vector<16x32xf32>
    %51 = arith.addf %49, %50 : vector<16x32xf32>
    %cst_28 = arith.constant 0.000000e+00 : f32
    %52 = vector.broadcast %cst_28 : f32 to vector<16x32xf32>
    %53 = arith.maximumf %51, %52 : vector<16x32xf32>
    %cst_29 = arith.constant dense<0.000000e+00> : vector<16x32xf32>
    %54 = tpu.matmul %53, %34, %cst_29 {dimension_numbers = #tpu.dot_dimension_numbers<[1], [0], [0], [1], [0, 0, 1, 1], [], []>} : vector<16x32xf32>, vector<32x32xf32>, vector<16x32xf32> -> vector<16x32xf32>
    %55 = vector.broadcast %39 : vector<1x32xf32> to vector<16x32xf32>
    %56 = arith.addf %54, %55 : vector<16x32xf32>
    %57 = vector.broadcast %32 : vector<16x1xf32> to vector<16x32xf32>
    %58 = arith.mulf %57, %56 : vector<16x32xf32>
    %cst_30 = arith.constant dense<0.000000e+00> : vector<16x32xf32>
    %59 = tpu.matmul %25, %58, %cst_30 {dimension_numbers = #tpu.dot_dimension_numbers<[1], [0], [0], [1], [0, 0, 1, 1], [], []>} : vector<16x16xf32>, vector<16x32xf32>, vector<16x32xf32> -> vector<16x32xf32>
    %60 = vector.broadcast %32 : vector<16x1xf32> to vector<16x32xf32>
    %61 = arith.mulf %60, %59 : vector<16x32xf32>
    %62 = vector.broadcast %38 : vector<1x32xf32> to vector<16x32xf32>
    %63 = arith.addf %61, %62 : vector<16x32xf32>
    %cst_31 = arith.constant 0.000000e+00 : f32
    %64 = vector.broadcast %cst_31 : f32 to vector<16x32xf32>
    %65 = arith.maximumf %63, %64 : vector<16x32xf32>
    %66 = tpu.concatenate %53, %65 in 1 : vector<16x32xf32>, vector<16x32xf32> -> vector<16x64xf32>
    %cst_32 = arith.constant dense<0.000000e+00> : vector<16x128xf32>
    %67 = tpu.matmul %66, %35, %cst_32 {dimension_numbers = #tpu.dot_dimension_numbers<[1], [0], [0], [1], [0, 0, 1, 1], [], []>} : vector<16x64xf32>, vector<64x128xf32>, vector<16x128xf32> -> vector<16x128xf32>
    %68 = vector.broadcast %40 : vector<1x128xf32> to vector<16x128xf32>
    %69 = arith.addf %67, %68 : vector<16x128xf32>
    %70 = arith.negf %69 : vector<16x128xf32>
    %71 = math.exp %70 : vector<16x128xf32>
    %cst_33 = arith.constant 1.000000e+00 : f32
    %72 = vector.broadcast %cst_33 : f32 to vector<16x128xf32>
    %73 = arith.addf %72, %71 : vector<16x128xf32>
    %74 = arith.divf %72, %73 : vector<16x128xf32>
    %75 = vector.extract_strided_slice %74 {offsets = [0, 0], sizes = [16, 32], strides = [1, 1]} : vector<16x128xf32> to vector<16x32xf32>
    %76 = vector.extract_strided_slice %69 {offsets = [0, 96], sizes = [16, 32], strides = [1, 1]} : vector<16x128xf32> to vector<16x32xf32>
    %77 = math.tanh %76 : vector<16x32xf32>
    %78 = arith.mulf %75, %77 : vector<16x32xf32>
    %79 = vector.extract_strided_slice %74 {offsets = [0, 64], sizes = [16, 32], strides = [1, 1]} : vector<16x128xf32> to vector<16x32xf32>
    %80 = math.tanh %78 : vector<16x32xf32>
    %81 = arith.mulf %79, %80 : vector<16x32xf32>
    %cst_34 = arith.constant dense<0.000000e+00> : vector<16x128xf32>
    %82 = tpu.matmul %81, %36, %cst_34 {dimension_numbers = #tpu.dot_dimension_numbers<[1], [0], [0], [1], [0, 0, 1, 1], [], []>} : vector<16x32xf32>, vector<32x128xf32>, vector<16x128xf32> -> vector<16x128xf32>
    %83 = vector.broadcast %41 : vector<1x128xf32> to vector<16x128xf32>
    %84 = arith.addf %82, %83 : vector<16x128xf32>
    %85 = arith.negf %84 : vector<16x128xf32>
    %86 = math.exp %85 : vector<16x128xf32>
    %cst_35 = arith.constant 1.000000e+00 : f32
    %87 = vector.broadcast %cst_35 : f32 to vector<16x128xf32>
    %88 = arith.addf %87, %86 : vector<16x128xf32>
    %89 = arith.divf %87, %88 : vector<16x128xf32>
    %90 = vector.extract_strided_slice %89 {offsets = [0, 0], sizes = [16, 32], strides = [1, 1]} : vector<16x128xf32> to vector<16x32xf32>
    %91 = vector.extract_strided_slice %84 {offsets = [0, 96], sizes = [16, 32], strides = [1, 1]} : vector<16x128xf32> to vector<16x32xf32>
    %92 = math.tanh %91 : vector<16x32xf32>
    %93 = arith.mulf %90, %92 : vector<16x32xf32>
    %94 = vector.extract_strided_slice %89 {offsets = [0, 64], sizes = [16, 32], strides = [1, 1]} : vector<16x128xf32> to vector<16x32xf32>
    %95 = math.tanh %93 : vector<16x32xf32>
    %96 = arith.mulf %94, %95 : vector<16x32xf32>
    %cst_36 = arith.constant 0.000000e+00 : f32
    %97 = vector.broadcast %cst_36 : f32 to vector<16x32xf32>
    %98 = arith.maximumf %81, %97 : vector<16x32xf32>
    %99 = vector.extract_strided_slice %42 {offsets = [0, 0], sizes = [1, 32], strides = [1, 1]} : vector<1x128xf32> to vector<1x32xf32>
    %100 = vector.broadcast %99 : vector<1x32xf32> to vector<16x32xf32>
    %101 = arith.mulf %98, %100 : vector<16x32xf32>
    %cst_37 = arith.constant dense<0.000000e+00> : vector<16xf32>
    %102 = vector.multi_reduction <add>, %101, %cst_37 [1] : vector<16x32xf32> to vector<16xf32>
    %103 = vector.shape_cast %102 : vector<16xf32> to vector<16x1xf32>
    %cst_38 = arith.constant 0.000000e+00 : f32
    %104 = vector.broadcast %cst_38 : f32 to vector<16x32xf32>
    %105 = arith.maximumf %96, %104 : vector<16x32xf32>
    %106 = vector.extract_strided_slice %42 {offsets = [0, 32], sizes = [1, 32], strides = [1, 1]} : vector<1x128xf32> to vector<1x32xf32>
    %107 = vector.broadcast %106 : vector<1x32xf32> to vector<16x32xf32>
    %108 = arith.mulf %105, %107 : vector<16x32xf32>
    %cst_39 = arith.constant dense<0.000000e+00> : vector<16xf32>
    %109 = vector.multi_reduction <add>, %108, %cst_39 [1] : vector<16x32xf32> to vector<16xf32>
    %110 = vector.shape_cast %109 : vector<16xf32> to vector<16x1xf32>
    %111 = arith.addf %103, %110 : vector<16x1xf32>
    %cst_40 = arith.constant 0.000000e+00 : f32
    %112 = vector.broadcast %cst_40 : f32 to vector<16x4xf32>
    %113 = arith.maximumf %0, %112 : vector<16x4xf32>
    %114 = vector.extract_strided_slice %42 {offsets = [0, 64], sizes = [1, 4], strides = [1, 1]} : vector<1x128xf32> to vector<1x4xf32>
    %115 = vector.broadcast %114 : vector<1x4xf32> to vector<16x4xf32>
    %116 = arith.mulf %113, %115 : vector<16x4xf32>
    %cst_41 = arith.constant dense<0.000000e+00> : vector<16xf32>
    %117 = vector.multi_reduction <add>, %116, %cst_41 [1] : vector<16x4xf32> to vector<16xf32>
    %118 = vector.shape_cast %117 : vector<16xf32> to vector<16x1xf32>
    %119 = arith.addf %111, %118 : vector<16x1xf32>
    %120 = vector.broadcast %43 : vector<1x1xf32> to vector<16x1xf32>
    %121 = arith.addf %119, %120 : vector<16x1xf32>
    %122 = math.tanh %121 : vector<16x1xf32>
    %c0_42 = arith.constant 0 : index
    %c0_43 = arith.constant 0 : index
    %123 = vector.load %arg3[%c0_42, %c0_43] : memref<16x1xf32, #tpu.memory_space<vmem>>, vector<16x1xf32>
    tpu.vector_store %arg3[%c0_42, %c0_43], %122 {strides = array<i32>} : memref<16x1xf32, #tpu.memory_space<vmem>>, vector<16x1xf32>,
    return
  }
}

</mosaic_0001>

<llo_original>
// kernel: mpnnlstm_forward.1
$region0: #{mpnnlstm_forward.1}
  #allocation0 [shape = 'u32[]', space=smem, size = 0x4, offset = 0x4, fixed_abs, tag = 'smem constant byte address 0x4 - core index']
  #allocation1 [shape = 'u32[72,128]{1,0:T(1,128)}', space=vmem, size = 0x9000, scoped, tag = 'internal scratch']
  %s0 = inlined_call_operand.vmem [shape: f32[8,128], index: 0, kind: input, shape index: {}]
  %s1 = inlined_call_operand.vmem [shape: f32[16,4], index: 1, kind: input, shape index: {}]
  %s2 = inlined_call_operand.hbm [shape: f32[144,128], index: 2, kind: input, shape index: {}]
  %s3 = inlined_call_operand.vmem [shape: f32[16,1], index: 3, kind: output, shape index: {}]
  %s4 = sld [smem:[#allocation0]]
  $region26: #{mpnnlstm_forward.1} parent=0
    _
  %s6 = ssub.s32 1, %s4
  %s7 = scalar_select 0, %s6, %s4
  $region1: #{mpnnlstm_forward.1} parent=0
    #allocation2 [shape = 'u8[73728]{0}', space=vmem, size = 0x12000, scoped, tag = 'input window, operand 2, single buffered']
    #allocation3 [shape = 's32[1]{0}', space=sflag, size = 0x4, scoped, tag = 'scoped memory for mpnnlstm_forward.1']
    %8 = vsyncpa [#allocation3], 0
    // Predicated region
    $region2: #{mpnnlstm_forward.1} parent=1 // pred_check
      _
    $region3: #{mpnnlstm_forward.1} parent=1 // pred_check_branch
      %10 = sbr.rel (0) target = $region5
    $region4: #{mpnnlstm_forward.1} parent=1 // pred_region
      _
    $region5: #{mpnnlstm_forward.1} parent=1 // pred_fallthru
      _
    // Predicated region
    $region6: #{mpnnlstm_forward.1} parent=1 // pred_check
      _
    $region7: #{mpnnlstm_forward.1} parent=1 // pred_check_branch
      %12 = sbr.rel (0) target = $region9
    $region8: #{mpnnlstm_forward.1} parent=1 // pred_region
      _
    $region9: #{mpnnlstm_forward.1} parent=1 // pred_fallthru
      _
    // Predicated region
    $region10: #{mpnnlstm_forward.1} parent=1 // pred_check
      _
    $region11: #{mpnnlstm_forward.1} parent=1 // pred_check_branch
      %14 = sbr.rel (0) target = $region13
    $region12: #{mpnnlstm_forward.1} parent=1 // pred_region
      %16 = vsyncadd [#allocation3], 0
      %s17 = sshll.u32 %s2, 4
      %s18 = int_to_ptr.hbm [resolvable:$true] %s17
      %s19 = sshll.u32 [#allocation2], 4
      %s20 = int_to_ptr.vmem [resolvable:$true] %s19
      %25 = dma.hbm_to_vmem [thread:$0]  %s18, 2304, %s20, [#allocation3], 128, 128, 8
    $region13: #{mpnnlstm_forward.1} parent=1 // pred_fallthru
      _
    // Predicated region
    $region14: #{mpnnlstm_forward.1} parent=1 // pred_check
      _
    $region15: #{mpnnlstm_forward.1} parent=1 // pred_check_branch
      %27 = sbr.rel (0) target = $region17
    $region16: #{mpnnlstm_forward.1} parent=1 // pred_region
      %29 = dma.done [#allocation3], 2304
    $region17: #{mpnnlstm_forward.1} parent=1 // pred_fallthru
      _
    %v30 = vld [vmem:[%s1] sm:$0xff]
    %v31 = vld [vmem:[%s1 + $0x8] sm:$0xff]
    %v32 = vld [vmem:[%s0] sm:$0x1]
    %v33 = vld [vmem:[%s0 + $0x1] sm:$0x1]
    %v34 = vld [vmem:[%s0 + $0x2] sm:$0x1]
    %v35 = vlaneseq
    %v36 = vshrl.u32 %v35, 7
    %v37 = vadd.s32 %v36, 8
    %v38 = vcvt.s32.f32 %v36
    %v39 = vcvt.s32.f32 %v37
    %v40 = vperm.slane %v33, 0
    %vm41 = vcmp.eq.f32.partialorder %v38, %v40
    %vm42 = vcmp.eq.f32.partialorder %v39, %v40
    %v43 = vsel %vm41, 1.0, 0.0
    %v44 = vsel %vm42, 1.0, 0.0
    %v45 = vperm.slane %v32, 0
    %vm46 = vcmp.eq.f32.partialorder %v38, %v45
    %vm47 = vcmp.eq.f32.partialorder %v39, %v45
    %v48 = vsel %vm46, 1.0, 0.0
    %v49 = vsel %vm47, 1.0, 0.0
    %v50 = vperm.slane %v34, 0
    %v51 = vmul.f32 %v43, %v50
    %v52 = vmul.f32 %v44, %v50
    %v53 = vlaneseq
    %v54 = vand.u32 %v53, 127
    %vm55 = vcmp.eq.s32.totalorder %v36, %v54
    %vm56 = vcmp.eq.s32.totalorder %v37, %v54
    %v57 = vsel %vm55, 1.0, 0.0
    %v58 = vsel %vm56, 1.0, 0.0
    %59 = vmatpush.xpose.msra.mxu0 0.0
    %60 = vmatpush.xpose.msra.mxu0 0.0
    %61 = vmatpush.xpose.msra.mxu0 0.0
    %62 = vmatpush.xpose.msra.mxu0 0.0
    %63 = vmatpush.xpose.msra.mxu0 0.0
    %64 = vmatpush.xpose.msra.mxu0 0.0
    %65 = vmatpush.xpose.msra.mxu0 0.0
    %66 = vmatpush.xpose.msra.mxu0 0.0
    %67 = vmatpush.xpose.msra.mxu0 0.0
    %68 = vmatpush.xpose.msra.mxu0 0.0
    %69 = vmatpush.xpose.msra.mxu0 0.0
    %70 = vmatpush.xpose.msra.mxu0 0.0
    %71 = vmatpush.xpose.msra.mxu0 0.0
    %72 = vmatpush.xpose.msra.mxu0 0.0
    %73 = vmatpush.xpose.msra.mxu0 %v49
    %74 = vmatpush.xpose.msra.mxu0 %v48
    %75 = vmatmul.f32.gmra.mxu0 %v51
    %v76 = vpop.f32.mrf.mxu0
    %v77 = vadd.f32 %v57, %v76
    %78 = vmatmul.f32.gmra.mxu0 %v52
    %v79 = vpop.f32.mrf.mxu0
    %v80 = vadd.f32 %v58, %v79
    %81 = vdwg.mxu0
    %vm82 = vcmask 130048
    %v83 = vsel %vm82, %v77, 0.0
    %84 = vadd.xlane.f32.xlu0 %v83
    %v85 = vpop.xlane.xlu0 %84
    %v86 = vsel %vm82, %v80, 0.0
    %87 = vadd.xlane.f32.xlu0 %v86
    %v88 = vpop.xlane.xlu0 %87
    %vm89 = vcmp.gt.f32.partialorder %v85, 0.0
    %vm90 = vcmp.gt.f32.partialorder %v88, 0.0
    %v91 = vrsqrt.pop %v85
    %v92 = vmul.f32 %v91, %v85
    %v93 = vmul.f32 %v92, %v91
    %v94 = vmul.f32 0.5, %v93
    %v95 = vsub.f32 1.5, %v94
    %v96 = vmul.f32 %v91, %v95
    %vm97 = vweird.f32 %v85
    %vm98 = vweird.f32 %v91
    %vm99 = vmor %vm97, %vm98
    %v100 = vsel %vm99, %v91, %v96
    %v101 = vrsqrt.pop %v88
    %v102 = vmul.f32 %v101, %v88
    %v103 = vmul.f32 %v102, %v101
    %v104 = vmul.f32 0.5, %v103
    %v105 = vsub.f32 1.5, %v104
    %v106 = vmul.f32 %v101, %v105
    %vm107 = vweird.f32 %v88
    %vm108 = vweird.f32 %v101
    %vm109 = vmor %vm107, %vm108
    %v110 = vsel %vm109, %v101, %v106
    %v111 = vsel %vm89, %v100, 0.0
    %v112 = vsel %vm90, %v110, 0.0
    %v113 = vld [vmem:[#allocation2] sm:$0xf]
    %v114 = vld [vmem:[#allocation2 + $0x8] sm:$0xff]
    %v115 = vld [vmem:[#allocation2 + $0x10] sm:$0xff]
    %v116 = vld [vmem:[#allocation2 + $0x18] sm:$0xff]
    %v117 = vld [vmem:[#allocation2 + $0x20] sm:$0xff]
    %v118 = vld [vmem:[#allocation2 + $0x28] sm:$0xff]
    %v119 = vld [vmem:[#allocation2 + $0x30] sm:$0xff]
    %v120 = vld [vmem:[#allocation2 + $0x38] sm:$0xff]
    %v121 = vld [vmem:[#allocation2 + $0x40] sm:$0xff]
    %v122 = vld [vmem:[#allocation2 + $0x48] sm:$0xff]
    %v123 = vld [vmem:[#allocation2 + $0x50] sm:$0xff]
    %v124 = vld [vmem:[#allocation2 + $0x58] sm:$0xff]
    %v125 = vld [vmem:[#allocation2 + $0x60] sm:$0xff]
    %v126 = vld [vmem:[#allocation2 + $0x68] sm:$0xff]
    %v127 = vld [vmem:[#allocation2 + $0x70] sm:$0xff]
    %v128 = vld [vmem:[#allocation2 + $0x78] sm:$0xff]
    %v129 = vld [vmem:[#allocation2 + $0x80] sm:$0xff]
    %v130 = vld [vmem:[#allocation2 + $0x88] sm:$0x1]
    %v131 = vld [vmem:[#allocation2 + $0x89] sm:$0x1]
    %v132 = vld [vmem:[#allocation2 + $0x8a] sm:$0x1]
    %v133 = vld [vmem:[#allocation2 + $0x8b] sm:$0x1]
    %v134 = vld [vmem:[#allocation2 + $0x8c] sm:$0x1]
    %v135 = vld [vmem:[#allocation2 + $0x8d] sm:$0x1]
    %v136 = vld [vmem:[#allocation2 + $0x8e] sm:$0x1]
    %vm137 = vcmask 31744
    %v139 = vsel %vm137, %v30, 0
    %v142 = vsel %vm137, %v31, 0
    %vm144 = vcmask 1043456
    %v146 = vsel %vm144, %v113, 0
    %148 = vmatpush.msra.mxu0 0.0
    %149 = vmatpush.msra.mxu0 0.0
    %150 = vmatpush.msra.mxu0 0.0
    %151 = vmatpush.msra.mxu0 0.0
    %152 = vmatpush.msra.mxu0 0.0
    %153 = vmatpush.msra.mxu0 0.0
    %154 = vmatpush.msra.mxu0 0.0
    %155 = vmatpush.msra.mxu0 0.0
    %156 = vmatpush.msra.mxu0 0.0
    %157 = vmatpush.msra.mxu0 0.0
    %158 = vmatpush.msra.mxu0 0.0
    %159 = vmatpush.msra.mxu0 0.0
    %160 = vmatpush.msra.mxu0 0.0
    %161 = vmatpush.msra.mxu0 0.0
    %162 = vmatpush.msra.mxu0 0.0
    %163 = vmatpush.msra.mxu0 %v146
    %164 = vmatmul.f32.gmra.mxu0 %v139
    %v165 = vpop.f32.mrf.mxu0
    %v166 = vadd.f32 0.0, %v165
    %167 = vmatmul.f32.gmra.mxu0 %v142
    %v168 = vpop.f32.mrf.mxu0
    %v169 = vadd.f32 0.0, %v168
    %170 = vdwg.mxu0
    %v171 = vmul.f32 %v111, %v166
    %v172 = vmul.f32 %v112, %v169
    %v174 = vsel %vm82, %v77, 0
    %v177 = vsel %vm82, %v80, 0
    %179 = vmatpush.msra.mxu0 0.0
    %180 = vmatpush.msra.mxu0 0.0
    %181 = vmatpush.msra.mxu0 0.0
    %182 = vmatpush.msra.mxu0 0.0
    %183 = vmatpush.msra.mxu0 0.0
    %184 = vmatpush.msra.mxu0 0.0
    %185 = vmatpush.msra.mxu0 0.0
    %186 = vmatpush.msra.mxu0 0.0
    %187 = vmatpush.msra.mxu0 0.0
    %188 = vmatpush.msra.mxu0 0.0
    %189 = vmatpush.msra.mxu0 0.0
    %190 = vmatpush.msra.mxu0 0.0
    %191 = vmatpush.msra.mxu0 0.0
    %192 = vmatpush.msra.mxu0 0.0
    %193 = vmatpush.msra.mxu0 %v172
    %194 = vmatpush.msra.mxu0 %v171
    %195 = vmatmul.f32.gmra.mxu0 %v174
    %v196 = vpop.f32.mrf.mxu0
    %v197 = vadd.f32 0.0, %v196
    %198 = vmatmul.f32.gmra.mxu0 %v177
    %v199 = vpop.f32.mrf.mxu0
    %v200 = vadd.f32 0.0, %v199
    %201 = vdwg.mxu0
    %v202 = vmul.f32 %v111, %v197
    %v203 = vmul.f32 %v112, %v200
    %v204 = vperm.slane %v130, 0
    %v205 = vadd.f32 %v202, %v204
    %v206 = vadd.f32 %v203, %v204
    %v207 = vmax.f32 %v205, 0.0
    %v208 = vmax.f32 %v206, 0.0
    %v209 = vperm.slane %v132, 0
    %vm210 = vcmask 261120
    %v212 = vsel %vm210, %v207, 0
    %v215 = vsel %vm210, %v208, 0
    %217 = vmatpush.msra.mxu0 0.0
    %218 = vmatpush.msra.mxu0 0.0
    %219 = vmatpush.msra.mxu0 0.0
    %220 = vmatpush.msra.mxu0 0.0
    %221 = vmatpush.msra.mxu0 0.0
    %222 = vmatpush.msra.mxu0 0.0
    %223 = vmatpush.msra.mxu0 0.0
    %224 = vmatpush.msra.mxu0 0.0
    %225 = vmatpush.msra.mxu0 0.0
    %226 = vmatpush.msra.mxu0 0.0
    %227 = vmatpush.msra.mxu0 0.0
    %228 = vmatpush.msra.mxu0 0.0
    %229 = vmatpush.msra.mxu0 %v117
    %230 = vmatpush.msra.mxu0 %v116
    %231 = vmatpush.msra.mxu0 %v115
    %232 = vmatpush.msra.mxu0 %v114
    %233 = vmatmul.f32.gmra.mxu0 %v212
    %v234 = vpop.f32.mrf.mxu0
    %v235 = vadd.f32 %v209, %v234
    %236 = vmatmul.f32.gmra.mxu0 %v215
    %v237 = vpop.f32.mrf.mxu0
    %v238 = vadd.f32 %v209, %v237
    %239 = vdwg.mxu0
    %v240 = vmul.f32 %v111, %v235
    %v241 = vmul.f32 %v112, %v238
    %242 = vmatpush.msra.mxu0 0.0
    %243 = vmatpush.msra.mxu0 0.0
    %244 = vmatpush.msra.mxu0 0.0
    %245 = vmatpush.msra.mxu0 0.0
    %246 = vmatpush.msra.mxu0 0.0
    %247 = vmatpush.msra.mxu0 0.0
    %248 = vmatpush.msra.mxu0 0.0
    %249 = vmatpush.msra.mxu0 0.0
    %250 = vmatpush.msra.mxu0 0.0
    %251 = vmatpush.msra.mxu0 0.0
    %252 = vmatpush.msra.mxu0 0.0
    %253 = vmatpush.msra.mxu0 0.0
    %254 = vmatpush.msra.mxu0 0.0
    %255 = vmatpush.msra.mxu0 0.0
    %256 = vmatpush.msra.mxu0 %v241
    %257 = vmatpush.msra.mxu0 %v240
    %258 = vmatmul.f32.gmra.mxu0 %v174
    %v259 = vpop.f32.mrf.mxu0
    %v260 = vadd.f32 0.0, %v259
    %261 = vmatmul.f32.gmra.mxu0 %v177
    %v262 = vpop.f32.mrf.mxu0
    %v263 = vadd.f32 0.0, %v262
    %264 = vdwg.mxu0
    %v265 = vmul.f32 %v111, %v260
    %v266 = vmul.f32 %v112, %v263
    %v267 = vperm.slane %v131, 0
    %v268 = vadd.f32 %v265, %v267
    %v269 = vadd.f32 %v266, %v267
    %v270 = vmax.f32 %v268, 0.0
    %v271 = vmax.f32 %v269, 0.0
    %274 = vrot.lane.b32.xlu0 %v270, 32
    %v275 = vpop.permute.xlu0 %274
    %276 = vrot.lane.b32.xlu0 %v271, 32
    %v277 = vpop.permute.xlu0 %276
    %v280 = vsel %vm210, %v207, %v275
    %v281 = vsel %vm210, %v208, %v277
    %v282 = vperm.slane %v133, 0
    %vm283 = vcmask 523264
    %v285 = vsel %vm283, %v280, 0
    %v288 = vsel %vm283, %v281, 0
    %290 = vmatpush.msra.mxu0 0.0
    %291 = vmatpush.msra.mxu0 0.0
    %292 = vmatpush.msra.mxu0 0.0
    %293 = vmatpush.msra.mxu0 0.0
    %294 = vmatpush.msra.mxu0 0.0
    %295 = vmatpush.msra.mxu0 0.0
    %296 = vmatpush.msra.mxu0 0.0
    %297 = vmatpush.msra.mxu0 0.0
    %298 = vmatpush.msra.mxu0 %v125
    %299 = vmatpush.msra.mxu0 %v124
    %300 = vmatpush.msra.mxu0 %v123
    %301 = vmatpush.msra.mxu0 %v122
    %302 = vmatpush.msra.mxu0 %v121
    %303 = vmatpush.msra.mxu0 %v120
    %304 = vmatpush.msra.mxu0 %v119
    %305 = vmatpush.msra.mxu0 %v118
    %306 = vmatmul.f32.gmra.mxu0 %v285
    %v307 = vpop.f32.mrf.mxu0
    %v308 = vadd.f32 %v282, %v307
    %309 = vmatmul.f32.gmra.mxu0 %v288
    %v310 = vpop.f32.mrf.mxu0
    %v311 = vadd.f32 %v282, %v310
    %312 = vdwg.mxu0
    %v313 = vxor.u32 %v308, 2147483648
    %v314 = vxor.u32 %v311, 2147483648
    %v315 = vmul.f32 %v313, 1.442695
    %v316 = vpow.pop %v315
    %v317 = vmul.f32 %v314, 1.442695
    %v318 = vpow.pop %v317
    %v319 = vadd.f32 %v316, 1.0
    %v320 = vadd.f32 %v318, 1.0
    %v321 = vrcp.pop %v319
    %v322 = vmul.f32 %v319, %v321
    %v323 = vsub.f32 1.0, %v322
    %v324 = vmul.f32 %v321, %v323
    %v325 = vadd.f32 %v321, %v324
    %vm326 = vweird.f32 %v319
    %vm327 = vweird.f32 %v321
    %vm328 = vmor %vm326, %vm327
    %v329 = vsel %vm328, %v321, %v325
    %v330 = vand.u32 2147483647, %v319
    %vm331 = vcmp.eq.f32.partialorder %v330, 8.507059e+37
    %v332 = vand.u32 %v319, 2147483648
    %v333 = vor.u32 1.1754944e-38, %v332
    %v334 = vsel %vm331, %v333, %v329
    %v335 = vmul.f32 1.0, %v334
    %v336 = vrcp.pop %v320
    %v337 = vmul.f32 %v320, %v336
    %v338 = vsub.f32 1.0, %v337
    %v339 = vmul.f32 %v336, %v338
    %v340 = vadd.f32 %v336, %v339
    %vm341 = vweird.f32 %v320
    %vm342 = vweird.f32 %v336
    %vm343 = vmor %vm341, %vm342
    %v344 = vsel %vm343, %v336, %v340
    %v345 = vand.u32 2147483647, %v320
    %vm346 = vcmp.eq.f32.partialorder %v345, 8.507059e+37
    %v347 = vand.u32 %v320, 2147483648
    %v348 = vor.u32 1.1754944e-38, %v347
    %v349 = vsel %vm346, %v348, %v344
    %v350 = vmul.f32 1.0, %v349
    %v351 = vtanh.pop %v308
    %v352 = vtanh.pop %v311
    %355 = vrot.lane.b32.xlu0 %v351, 32
    %v356 = vpop.permute.xlu0 %355
    %357 = vrot.lane.b32.xlu0 %v352, 32
    %v358 = vpop.permute.xlu0 %357
    %v361 = vmul.f32 %v335, %v356
    %v362 = vmul.f32 %v350, %v358
    %v363 = vtanh.pop %v361
    %v364 = vtanh.pop %v362
    %367 = vrot.lane.b32.xlu0 %v363, 64
    %v368 = vpop.permute.xlu0 %367
    %369 = vrot.lane.b32.xlu0 %v364, 64
    %v370 = vpop.permute.xlu0 %369
    %v373 = vmul.f32 %v335, %v368
    %v374 = vmul.f32 %v350, %v370
    %v375 = vperm.slane %v134, 0
    %378 = vrot.lane.b32.xlu0 %v373, 64
    %v379 = vpop.permute.xlu0 %378
    %380 = vrot.lane.b32.xlu0 %v374, 64
    %v381 = vpop.permute.xlu0 %380
    %v382 = vsel %vm210, %v379, 0
    %v384 = vsel %vm210, %v381, 0
    %386 = vmatpush.msra.mxu0 0.0
    %387 = vmatpush.msra.mxu0 0.0
    %388 = vmatpush.msra.mxu0 0.0
    %389 = vmatpush.msra.mxu0 0.0
    %390 = vmatpush.msra.mxu0 0.0
    %391 = vmatpush.msra.mxu0 0.0
    %392 = vmatpush.msra.mxu0 0.0
    %393 = vmatpush.msra.mxu0 0.0
    %394 = vmatpush.msra.mxu0 0.0
    %395 = vmatpush.msra.mxu0 0.0
    %396 = vmatpush.msra.mxu0 0.0
    %397 = vmatpush.msra.mxu0 0.0
    %398 = vmatpush.msra.mxu0 %v129
    %399 = vmatpush.msra.mxu0 %v128
    %400 = vmatpush.msra.mxu0 %v127
    %401 = vmatpush.msra.mxu0 %v126
    %402 = vmatmul.f32.gmra.mxu0 %v382
    %v403 = vpop.f32.mrf.mxu0
    %v404 = vadd.f32 %v375, %v403
    %405 = vmatmul.f32.gmra.mxu0 %v384
    %v406 = vpop.f32.mrf.mxu0
    %v407 = vadd.f32 %v375, %v406
    %408 = vdwg.mxu0
    %v409 = vxor.u32 %v404, 2147483648
    %v410 = vxor.u32 %v407, 2147483648
    %v411 = vmul.f32 %v409, 1.442695
    %v412 = vpow.pop %v411
    %v413 = vmul.f32 %v410, 1.442695
    %v414 = vpow.pop %v413
    %v415 = vadd.f32 %v412, 1.0
    %v416 = vadd.f32 %v414, 1.0
    %v417 = vrcp.pop %v415
    %v418 = vmul.f32 %v415, %v417
    %v419 = vsub.f32 1.0, %v418
    %v420 = vmul.f32 %v417, %v419
    %v421 = vadd.f32 %v417, %v420
    %vm422 = vweird.f32 %v415
    %vm423 = vweird.f32 %v417
    %vm424 = vmor %vm422, %vm423
    %v425 = vsel %vm424, %v417, %v421
    %v426 = vand.u32 2147483647, %v415
    %vm427 = vcmp.eq.f32.partialorder %v426, 8.507059e+37
    %v428 = vand.u32 %v415, 2147483648
    %v429 = vor.u32 1.1754944e-38, %v428
    %v430 = vsel %vm427, %v429, %v425
    %v431 = vmul.f32 1.0, %v430
    %v432 = vrcp.pop %v416
    %v433 = vmul.f32 %v416, %v432
    %v434 = vsub.f32 1.0, %v433
    %v435 = vmul.f32 %v432, %v434
    %v436 = vadd.f32 %v432, %v435
    %vm437 = vweird.f32 %v416
    %vm438 = vweird.f32 %v432
    %vm439 = vmor %vm437, %vm438
    %v440 = vsel %vm439, %v432, %v436
    %v441 = vand.u32 2147483647, %v416
    %vm442 = vcmp.eq.f32.partialorder %v441, 8.507059e+37
    %v443 = vand.u32 %v416, 2147483648
    %v444 = vor.u32 1.1754944e-38, %v443
    %v445 = vsel %vm442, %v444, %v440
    %v446 = vmul.f32 1.0, %v445
    %v447 = vtanh.pop %v404
    %v448 = vtanh.pop %v407
    %451 = vrot.lane.b32.xlu0 %v447, 32
    %v452 = vpop.permute.xlu0 %451
    %453 = vrot.lane.b32.xlu0 %v448, 32
    %v454 = vpop.permute.xlu0 %453
    %v457 = vmul.f32 %v431, %v452
    %v458 = vmul.f32 %v446, %v454
    %v459 = vtanh.pop %v457
    %v460 = vtanh.pop %v458
    %463 = vrot.lane.b32.xlu0 %v459, 64
    %v464 = vpop.permute.xlu0 %463
    %465 = vrot.lane.b32.xlu0 %v460, 64
    %v466 = vpop.permute.xlu0 %465
    %v469 = vmul.f32 %v431, %v464
    %v470 = vmul.f32 %v446, %v466
    %v471 = vmax.f32 %v373, 0.0
    %v472 = vmax.f32 %v374, 0.0
    %v473 = vperm.slane %v135, 0
    %475 = vrot.lane.b32.xlu0 %v473, 64
    %v476 = vpop.permute.xlu0 %475
    %v478 = vmul.f32 %v471, %v476
    %v479 = vmul.f32 %v472, %v476
    %482 = vrot.lane.b32.xlu0 %v478, 64
    %v483 = vpop.permute.xlu0 %482
    %484 = vrot.lane.b32.xlu0 %v479, 64
    %v485 = vpop.permute.xlu0 %484
    %v488 = vsel %vm210, %v483, 0.0
    %489 = vadd.xlane.f32.xlu0 %v488
    %v490 = vpop.xlane.xlu0 %489
    %v491 = vsel %vm210, %v485, 0.0
    %492 = vadd.xlane.f32.xlu0 %v491
    %v493 = vpop.xlane.xlu0 %492
    %v494 = vmax.f32 %v469, 0.0
    %v495 = vmax.f32 %v470, 0.0
    %496 = vrot.lane.b32.xlu0 %v473, 32
    %v497 = vpop.permute.xlu0 %496
    %v499 = vmul.f32 %v494, %v497
    %v500 = vmul.f32 %v495, %v497
    %503 = vrot.lane.b32.xlu0 %v499, 64
    %v504 = vpop.permute.xlu0 %503
    %505 = vrot.lane.b32.xlu0 %v500, 64
    %v506 = vpop.permute.xlu0 %505
    %v509 = vsel %vm210, %v504, 0.0
    %510 = vadd.xlane.f32.xlu0 %v509
    %v511 = vpop.xlane.xlu0 %510
    %v512 = vsel %vm210, %v506, 0.0
    %513 = vadd.xlane.f32.xlu0 %v512
    %v514 = vpop.xlane.xlu0 %513
    %v515 = vadd.f32 %v490, %v511
    %v516 = vadd.f32 %v493, %v514
    %v517 = vmax.f32 %v30, 0.0
    %v518 = vmax.f32 %v31, 0.0
    %v519 = vmul.f32 %v517, %v476
    %v520 = vmul.f32 %v518, %v476
    %v521 = vsel %vm137, %v519, 0.0
    %522 = vadd.xlane.f32.xlu0 %v521
    %v523 = vpop.xlane.xlu0 %522
    %v524 = vsel %vm137, %v520, 0.0
    %525 = vadd.xlane.f32.xlu0 %v524
    %v526 = vpop.xlane.xlu0 %525
    %v527 = vadd.f32 %v515, %v523
    %v528 = vadd.f32 %v516, %v526
    %v529 = vperm.slane %v136, 0
    %v530 = vadd.f32 %v527, %v529
    %v531 = vadd.f32 %v528, %v529
    %v532 = vtanh.pop %v530
    %v533 = vtanh.pop %v531
    %vm534 = vcmask 7168
    %535 = vst.msk [vmem:[%s3] sm:$0xff] %vm534, %v532
    %536 = vst.msk [vmem:[%s3 + $0x8] sm:$0xff] %vm534, %v533
    // Predicated region
    $region18: #{mpnnlstm_forward.1} parent=1 // pred_check
      _
    $region19: #{mpnnlstm_forward.1} parent=1 // pred_check_branch
      %538 = sbr.rel (0) target = $region21
    $region20: #{mpnnlstm_forward.1} parent=1 // pred_region
      _
    $region21: #{mpnnlstm_forward.1} parent=1 // pred_fallthru
      _
    // Predicated region
    $region22: #{mpnnlstm_forward.1} parent=1 // pred_check
      _
    $region23: #{mpnnlstm_forward.1} parent=1 // pred_check_branch
      %540 = sbr.rel (0) target = $region25
    $region24: #{mpnnlstm_forward.1} parent=1 // pred_region
      _
    $region25: #{mpnnlstm_forward.1} parent=1 // pred_fallthru
      _
    %541 = vsyncpa [#allocation3], 1

</llo_original>
